<compile_context>
chip_gen: v5e
topology: v5e:2x2
jax: 0.10.0
libtpu: 0.0.40
codegen_flags: <defaults>
</compile_context>

<pallas_src>
import functools
import math

import jax
import jax.numpy as jnp
import numpy as np
from jax.experimental import pallas as pl
from jax.experimental.pallas import tpu as pltpu

_LANE = 128

# Abramowitz & Stegun 7.1.26 erf polynomial constants, pre-scaled by the GELU 0.5 factor.
_GELU_P = 0.3275911
_GELU_A1 = 0.5 * 0.254829592
_GELU_A2 = 0.5 * -0.284496736
_GELU_A3 = 0.5 * 1.421413741
_GELU_A4 = 0.5 * -1.453152027
_GELU_A5 = 0.5 * 1.061405429
_INV_SQRT2 = 0.7071067811865476


def _gelu_exact(x):
    """torch.nn.GELU() default: 0.5 * x * (1 + erf(x / sqrt(2))).

    erf via A&S 7.1.26 (abs err ~1.5e-7). The divide goes to the EUP via approx reciprocal,
    the 0.5 is folded into the polynomial constants, and the sign handling is a single where:
        g = 0.5 * x * (1 - |erf(u)|)  ->  gelu = x - g (x >= 0) else g.
    """
    u = x * _INV_SQRT2
    au = jnp.abs(u)
    t = pl.reciprocal(1.0 + _GELU_P * au, approx=True)          # EUP slot, not a VALU divide
    poly = ((((_GELU_A5 * t + _GELU_A4) * t + _GELU_A3) * t + _GELU_A2) * t + _GELU_A1) * t
    g = x * poly * jnp.exp(-(au * au))                           # exp stays on the EUP
    return jnp.where(x >= 0.0, x - g, g)


def _ffn_kernel(x_ref, w1_ref, b1_ref, w2_ref, b2_ref, o_ref):
    # x_ref: (C, T) column slab (lane axis = spatial). w1: (4C, C), b1: (4C, 1) f32,
    # w2: (C, 4C), b2: (C, 1) f32, o_ref: (C, T).
    x = x_ref[...]
    # Matmul operands in the weights' dtype (bf16 by default -> bf16-native MXU rate),
    # f32 accumulation; bias add + GELU in f32.
    h = jnp.dot(w1_ref[...], x.astype(w1_ref.dtype),
                preferred_element_type=jnp.float32) + b1_ref[...]
    h = _gelu_exact(h)
    y = jnp.dot(w2_ref[...], h.astype(w2_ref.dtype),
                preferred_element_type=jnp.float32) + b2_ref[...]
    o_ref[...] = y.astype(o_ref.dtype)


def _round_up(x, m):
    return (x + m - 1) // m * m


def _vmem_budget_bytes():
    # Generation-aware budget: 75% of physical VMEM (~48 MiB on v7x, ~96 MiB on v5e/v6e).
    try:
        cap = int(pltpu.get_tpu_info().vmem_capacity_bytes)
    except Exception:
        cap = 64 << 20  # conservative fallback: v7x per-core VMEM
    return int(cap * 0.75)


def _vmem_step_bytes(t, c, c4, in_itemsize, w_itemsize):
    io = 2 * 2 * c * t * in_itemsize                       # x + out slabs, double-buffered
    wts = 2 * (c4 * c + c * c4) * w_itemsize + 2 * (c4 + c) * 4   # weights + f32 biases (x2 bufs)
    inter = 3 * c4 * t * 4                                 # f32 hidden + GELU temporaries
    return io + wts + inter


def _lane_tile_candidates(m_pad):
    # All multiples of 128 that evenly divide the (128-padded) spatial extent, descending.
    q = m_pad // _LANE
    divs = [d for d in range(1, q + 1) if q % d == 0]
    return sorted((d * _LANE for d in divs), reverse=True)


def _pick_spatial_tile(m_pad, n, c, c4, in_itemsize, w_itemsize, budget):
    cands = _lane_tile_candidates(m_pad)
    fitting = [t for t in cands
               if _vmem_step_bytes(t, c, c4, in_itemsize, w_itemsize) <= budget]
    if fitting:
        preferred = [t for t in fitting if t <= 8192] or fitting
        t = preferred[0]          # largest tile within budget (soft 8192 amortization cap)
    else:
        t = cands[-1]             # smallest lane-dense tile; let the compiler complain if huge
    # v7x has 2 TensorCores: keep the total grid >= 2 so both get work under "parallel".
    while n * (m_pad // t) < 2:
        smaller = [c_ for c_ in cands if c_ < t]
        if not smaller:
            break
        t = smaller[0]
    return t


def ffn_pallas(x_ncm, w1, b1, w2, b2, *, compute_dtype=jnp.bfloat16, buffer_count=None):
    """Fused 1x1conv -> GELU -> 1x1conv on x of shape (N, C, M), M a multiple of 128."""
    N, C, M = x_ncm.shape
    C4 = w1.shape[0]
    assert M % _LANE == 0, "spatial extent must be padded to a multiple of 128 by the caller"

    in_itemsize = jnp.dtype(x_ncm.dtype).itemsize
    w_itemsize = jnp.dtype(compute_dtype).itemsize
    budget = _vmem_budget_bytes()
    T = _pick_spatial_tile(M, N, C, C4, in_itemsize, w_itemsize, budget)
    grid = (N, M // T)

    step_bytes = _vmem_step_bytes(T, C, C4, in_itemsize, w_itemsize)
    vmem_limit = int(min(budget, max(16 << 20, 2 * step_bytes)))

    # Weights in the matmul compute dtype (bf16 default); biases stay f32.
    w1c = w1.astype(compute_dtype)
    w2c = w2.astype(compute_dtype)
    b1c = b1.reshape(C4, 1).astype(jnp.float32)
    b2c = b2.reshape(C, 1).astype(jnp.float32)

    # Optional deeper pipelining for the streamed slabs (useful on v5e if DMA is exposed).
    io_kwargs = {} if buffer_count is None else {"pipeline_mode": pl.Buffered(buffer_count)}

    return pl.pallas_call(
        _ffn_kernel,
        out_shape=jax.ShapeDtypeStruct((N, C, M), x_ncm.dtype),
        grid_spec=pltpu.PrefetchScalarGridSpec(
            num_scalar_prefetch=0,
            grid=grid,
            in_specs=[
                pl.BlockSpec((None, C, T), lambda n, j: (n, 0, j), **io_kwargs),  # x slab
                pl.BlockSpec((C4, C), lambda n, j: (0, 0)),                       # W1 (resident)
                pl.BlockSpec((C4, 1), lambda n, j: (0, 0)),                       # b1
                pl.BlockSpec((C, C4), lambda n, j: (0, 0)),                       # W2 (resident)
                pl.BlockSpec((C, 1), lambda n, j: (0, 0)),                        # b2
            ],
            out_specs=pl.BlockSpec((None, C, T), lambda n, j: (n, 0, j), **io_kwargs),
        ),
        compiler_params=pltpu.CompilerParams(
            dimension_semantics=("parallel", "parallel"),
            vmem_limit_bytes=vmem_limit,
        ),
    )(x_ncm, w1c, b1c, w2c, b2c)


def feedforward_network_forward(x_nchw, w1_oihw, b1, w2_oihw, b2,
                                *, compute_dtype=jnp.bfloat16, buffer_count=None):
    """FeedForwardNetwork.forward.

    x_nchw:  (N, C, H, W)
    w1_oihw: (4C, C, 1, 1), b1: (4C,)   -- proj_in  (PyTorch layouts)
    w2_oihw: (C, 4C, 1, 1), b2: (C,)    -- proj_out
    Returns (N, C, H, W).
    """
    N, C, H, W = x_nchw.shape
    C4 = w1_oihw.shape[0]
    M = H * W
    x2 = x_nchw.reshape(N, C, M)                 # free reshape, no transpose
    M_pad = _round_up(M, _LANE)
    if M_pad != M:
        # Lane-dense padding: keeps every store an unmasked vst and the tile size bounded.
        x2 = jnp.pad(x2, ((0, 0), (0, 0), (0, M_pad - M)))
    w1 = w1_oihw.reshape(C4, C)
    w2 = w2_oihw.reshape(C, C4)
    y = ffn_pallas(x2, w1, b1, w2, b2, compute_dtype=compute_dtype, buffer_count=buffer_count)
    if M_pad != M:
        y = y[:, :, :M]
    return y.reshape(N, C, H, W)


if __name__ == "__main__":
    key = jax.random.PRNGKey(0)
    k_x, k_w1, k_b1, k_w2, k_b2 = jax.random.split(key, 5)

    N, C, H, W = 2, 4, 16, 16
    C4 = 4 * C

    x = jax.random.normal(k_x, (N, C, H, W), dtype=jnp.float32)

    # nn.Conv2d default init: U(-1/sqrt(fan_in), 1/sqrt(fan_in)) for weight and bias.
    bound1 = 1.0 / math.sqrt(C * 1 * 1)
    w1 = jax.random.uniform(k_w1, (C4, C, 1, 1), jnp.float32, -bound1, bound1)
    b1 = jax.random.uniform(k_b1, (C4,), jnp.float32, -bound1, bound1)
    bound2 = 1.0 / math.sqrt(C4 * 1 * 1)
    w2 = jax.random.uniform(k_w2, (C, C4, 1, 1), jnp.float32, -bound2, bound2)
    b2 = jax.random.uniform(k_b2, (C,), jnp.float32, -bound2, bound2)

    # Reference: XLA 1x1 convs + exact (erf) GELU, mirroring the PyTorch module in f32.
    ref = jax.lax.conv_general_dilated(
        x, w1, window_strides=(1, 1), padding="VALID",
        dimension_numbers=("NCHW", "OIHW", "NCHW")) + b1.reshape(1, C4, 1, 1)
    ref = jax.nn.gelu(ref, approximate=False)
    ref = jax.lax.conv_general_dilated(
        ref, w2, window_strides=(1, 1), padding="VALID",
        dimension_numbers=("NCHW", "OIHW", "NCHW")) + b2.reshape(1, C, 1, 1)
    ref = np.asarray(ref)

    # 1) Strict check: f32 matmul path (only approximation is the erf polynomial + EUP recip).
    fwd_f32 = jax.jit(functools.partial(feedforward_network_forward,
                                        compute_dtype=jnp.float32))
    out_f32 = jax.block_until_ready(fwd_f32(x, w1, b1, w2, b2))
    assert out_f32.shape == (N, C, H, W), out_f32.shape
    assert np.allclose(np.asarray(out_f32), ref, atol=5e-3, rtol=5e-3)

    # 2) Default (fast) path: bf16 MXU operands, f32 accumulation.
    fwd = jax.jit(functools.partial(feedforward_network_forward,
                                    compute_dtype=jnp.bfloat16))
    out = jax.block_until_ready(fwd(x, w1, b1, w2, b2))
    assert out.shape == (N, C, H, W), out.shape
    assert np.allclose(np.asarray(out), ref, atol=3e-2, rtol=3e-2)

    print("KERNEL_OK")
</pallas_src>

<mosaic_0001>
module attributes {stable_mosaic.version = 11 : i64} {
  func.func @_ffn_kernel(%arg0: i32, %arg1: i32, %arg2: memref<1x4x256xf32, #tpu.memory_space<vmem>>, %arg3: memref<16x4xf32, #tpu.memory_space<vmem>>, %arg4: memref<16x1xf32, #tpu.memory_space<vmem>>, %arg5: memref<4x16xf32, #tpu.memory_space<vmem>>, %arg6: memref<4x1xf32, #tpu.memory_space<vmem>>, %arg7: memref<1x4x256xf32, #tpu.memory_space<vmem>>) attributes {dimension_semantics = [#tpu.dimension_semantics<parallel>, #tpu.dimension_semantics<parallel>], iteration_bounds = array<i64: 2, 1>, scalar_prefetch = 0 : i64, scratch_operands = 0 : i64, tpu.core_type = #tpu.core_type<tc>, window_params = [{transform_indices = @transform_0, window_bounds = array<i64: 1, 4, 256>}, {pipeline_mode = #tpu.pipeline_mode<synchronous>, transform_indices = @transform_1, window_bounds = array<i64: 16, 4>}, {pipeline_mode = #tpu.pipeline_mode<synchronous>, transform_indices = @transform_2, window_bounds = array<i64: 16, 1>}, {pipeline_mode = #tpu.pipeline_mode<synchronous>, transform_indices = @transform_3, window_bounds = array<i64: 4, 16>}, {pipeline_mode = #tpu.pipeline_mode<synchronous>, transform_indices = @transform_4, window_bounds = array<i64: 4, 1>}, {transform_indices = @transform_5, window_bounds = array<i64: 1, 4, 256>}]} {
    %c0 = arith.constant 0 : index
    %c0_0 = arith.constant 0 : index
    %c0_1 = arith.constant 0 : index
    %0 = vector.load %arg2[%c0, %c0_0, %c0_1] : memref<1x4x256xf32, #tpu.memory_space<vmem>>, vector<1x4x256xf32>
    %1 = vector.shape_cast %0 : vector<1x4x256xf32> to vector<4x256xf32>
    %c0_2 = arith.constant 0 : index
    %c0_3 = arith.constant 0 : index
    %2 = vector.load %arg3[%c0_2, %c0_3] : memref<16x4xf32, #tpu.memory_space<vmem>>, vector<16x4xf32>
    %cst = arith.constant dense<0.000000e+00> : vector<16x256xf32>
    %3 = tpu.matmul %2, %1, %cst {dimension_numbers = #tpu.dot_dimension_numbers<[1], [0], [0], [1], [0, 0, 1, 1], [], []>} : vector<16x4xf32>, vector<4x256xf32>, vector<16x256xf32> -> vector<16x256xf32>
    %c0_4 = arith.constant 0 : index
    %c0_5 = arith.constant 0 : index
    %4 = vector.load %arg4[%c0_4, %c0_5] : memref<16x1xf32, #tpu.memory_space<vmem>>, vector<16x1xf32>
    %5 = vector.broadcast %4 : vector<16x1xf32> to vector<16x256xf32>
    %6 = arith.addf %3, %5 : vector<16x256xf32>
    %cst_6 = arith.constant 0.707106769 : f32
    %7 = vector.broadcast %cst_6 : f32 to vector<16x256xf32>
    %8 = arith.mulf %6, %7 : vector<16x256xf32>
    %9 = math.absf %8 : vector<16x256xf32>
    %cst_7 = arith.constant 0.327591091 : f32
    %10 = vector.broadcast %cst_7 : f32 to vector<16x256xf32>
    %11 = arith.mulf %10, %9 : vector<16x256xf32>
    %cst_8 = arith.constant 1.000000e+00 : f32
    %12 = vector.broadcast %cst_8 : f32 to vector<16x256xf32>
    %13 = arith.addf %12, %11 : vector<16x256xf32>
    %14 = tpu.reciprocal %13 {approx = true} : vector<16x256xf32> -> vector<16x256xf32>
    %cst_9 = arith.constant 0.53070271 : f32
    %15 = vector.broadcast %cst_9 : f32 to vector<16x256xf32>
    %16 = arith.mulf %15, %14 : vector<16x256xf32>
    %cst_10 = arith.constant -0.72657603 : f32
    %17 = vector.broadcast %cst_10 : f32 to vector<16x256xf32>
    %18 = arith.addf %16, %17 : vector<16x256xf32>
    %19 = arith.mulf %18, %14 : vector<16x256xf32>
    %cst_11 = arith.constant 0.710706889 : f32
    %20 = vector.broadcast %cst_11 : f32 to vector<16x256xf32>
    %21 = arith.addf %19, %20 : vector<16x256xf32>
    %22 = arith.mulf %21, %14 : vector<16x256xf32>
    %cst_12 = arith.constant -0.142248362 : f32
    %23 = vector.broadcast %cst_12 : f32 to vector<16x256xf32>
    %24 = arith.addf %22, %23 : vector<16x256xf32>
    %25 = arith.mulf %24, %14 : vector<16x256xf32>
    %cst_13 = arith.constant 0.127414793 : f32
    %26 = vector.broadcast %cst_13 : f32 to vector<16x256xf32>
    %27 = arith.addf %25, %26 : vector<16x256xf32>
    %28 = arith.mulf %27, %14 : vector<16x256xf32>
    %29 = arith.mulf %6, %28 : vector<16x256xf32>
    %30 = arith.mulf %9, %9 : vector<16x256xf32>
    %cst_14 = arith.constant 0.000000e+00 : f32
    %31 = vector.broadcast %cst_14 : f32 to vector<16x256xf32>
    %32 = arith.subf %31, %30 : vector<16x256xf32>
    %33 = math.exp %32 : vector<16x256xf32>
    %34 = arith.mulf %29, %33 : vector<16x256xf32>
    %cst_15 = arith.constant 0.000000e+00 : f32
    %35 = vector.broadcast %cst_15 : f32 to vector<16x256xf32>
    %36 = arith.cmpf oge, %6, %35 : vector<16x256xf32>
    %37 = arith.subf %6, %34 : vector<16x256xf32>
    %38 = arith.select %36, %37, %34 : vector<16x256xi1>, vector<16x256xf32>
    %c0_16 = arith.constant 0 : index
    %c0_17 = arith.constant 0 : index
    %39 = vector.load %arg5[%c0_16, %c0_17] : memref<4x16xf32, #tpu.memory_space<vmem>>, vector<4x16xf32>
    %cst_18 = arith.constant dense<0.000000e+00> : vector<4x256xf32>
    %40 = tpu.matmul %39, %38, %cst_18 {dimension_numbers = #tpu.dot_dimension_numbers<[1], [0], [0], [1], [0, 0, 1, 1], [], []>} : vector<4x16xf32>, vector<16x256xf32>, vector<4x256xf32> -> vector<4x256xf32>
    %c0_19 = arith.constant 0 : index
    %c0_20 = arith.constant 0 : index
    %41 = vector.load %arg6[%c0_19, %c0_20] : memref<4x1xf32, #tpu.memory_space<vmem>>, vector<4x1xf32>
    %42 = vector.broadcast %41 : vector<4x1xf32> to vector<4x256xf32>
    %43 = arith.addf %40, %42 : vector<4x256xf32>
    %c0_21 = arith.constant 0 : index
    %c0_22 = arith.constant 0 : index
    %c0_23 = arith.constant 0 : index
    %44 = vector.load %arg7[%c0_21, %c0_22, %c0_23] : memref<1x4x256xf32, #tpu.memory_space<vmem>>, vector<1x4x256xf32>
    %45 = vector.shape_cast %44 : vector<1x4x256xf32> to vector<4x256xf32>
    %46 = vector.shape_cast %43 : vector<4x256xf32> to vector<1x4x256xf32>
    tpu.vector_store %arg7[%c0_21, %c0_22, %c0_23], %46 {strides = array<i32>} : memref<1x4x256xf32, #tpu.memory_space<vmem>>, vector<1x4x256xf32>,
    return
  }
  func.func @transform_0(%arg0: i32, %arg1: i32) -> (i32, i32, i32) {
    %c0_i32 = arith.constant 0 : i32
    %c0_i32_0 = arith.constant 0 : i32
    return %arg0, %c0_i32, %arg1 : i32, i32, i32
  }
  func.func @transform_1(%arg0: i32, %arg1: i32) -> (i32, i32) {
    %c0_i32 = arith.constant 0 : i32
    %c0_i32_0 = arith.constant 0 : i32
    %c0_i32_1 = arith.constant 0 : i32
    return %c0_i32, %c0_i32_0 : i32, i32
  }
  func.func @transform_2(%arg0: i32, %arg1: i32) -> (i32, i32) {
    %c0_i32 = arith.constant 0 : i32
    %c0_i32_0 = arith.constant 0 : i32
    %c0_i32_1 = arith.constant 0 : i32
    return %c0_i32, %c0_i32_0 : i32, i32
  }
  func.func @transform_3(%arg0: i32, %arg1: i32) -> (i32, i32) {
    %c0_i32 = arith.constant 0 : i32
    %c0_i32_0 = arith.constant 0 : i32
    %c0_i32_1 = arith.constant 0 : i32
    return %c0_i32, %c0_i32_0 : i32, i32
  }
  func.func @transform_4(%arg0: i32, %arg1: i32) -> (i32, i32) {
    %c0_i32 = arith.constant 0 : i32
    %c0_i32_0 = arith.constant 0 : i32
    %c0_i32_1 = arith.constant 0 : i32
    return %c0_i32, %c0_i32_0 : i32, i32
  }
  func.func @transform_5(%arg0: i32, %arg1: i32) -> (i32, i32, i32) {
    %c0_i32 = arith.constant 0 : i32
    %c0_i32_0 = arith.constant 0 : i32
    return %arg0, %c0_i32, %arg1 : i32, i32, i32
  }
}

</mosaic_0001>

<llo_original>
// kernel: feedforward_network_forward.1
$region0: #{feedforward_network_forward.1}
  #allocation0 [shape = 'u32[]', space=smem, size = 0x4, offset = 0x4, fixed_abs, tag = 'smem constant byte address 0x4 - core index']
  #allocation1 [shape = 'u32[72,128]{1,0:T(1,128)}', space=vmem, size = 0x9000, scoped, tag = 'internal scratch']
  %s0 = inlined_call_operand.vmem [shape: f32[2,4,256], index: 0, kind: input, shape index: {}]
  %s1 = inlined_call_operand.vmem [shape: f32[16,4], index: 1, kind: input, shape index: {}]
  %s2 = inlined_call_operand.vmem [shape: f32[16,1], index: 2, kind: input, shape index: {}]
  %s3 = inlined_call_operand.vmem [shape: f32[4,16], index: 3, kind: input, shape index: {}]
  %s4 = inlined_call_operand.vmem [shape: f32[4,1], index: 4, kind: input, shape index: {}]
  %s5 = inlined_call_operand.vmem [shape: f32[2,4,256], index: 5, kind: output, shape index: {}]
  %s6 = sld [smem:[#allocation0]]
  $region53: #{feedforward_network_forward.1} parent=0
    _
  %s8 = ssub.s32 1, %s6
  %s9 = scalar_select 0, %s8, %s6
  loop: start=0, step=1, limit=4
  $region2: #{feedforward_network_forward.1} parent=0 // loop_pre_header
    _
  $region3: #{feedforward_network_forward.1} parent=0 // loop_header
    %s11 = sphi 0, %s15
    %p12 = scmp.ge.s32.totalorder %s11, 4
    %s18 = sphi 0, %s30
    %s19 = sphi 0, %s26
    %s20 = sphi 0, %s18
    %s21 = sphi 0, %s19
    %s22 = sphi 0, %s20
    %s23 = sphi 0, %s21
    %s35 = sphi 0, %s37
    %s38 = sphi 0, %s35
    %s39 = sphi 0, %s38
    %s55 = sphi 0, %s39
    %s59 = sphi 0, %s59
    %s61 = sphi 0, %s59
    %s62 = sphi 0, %s61
    %s76 = sphi 0, %s62
    %s80 = sphi 0, %s80
    %s82 = sphi 0, %s80
    %s83 = sphi 0, %s82
    %s97 = sphi 0, %s83
    %s101 = sphi 0, %s101
    %s103 = sphi 0, %s101
    %s104 = sphi 0, %s103
    %s118 = sphi 0, %s104
    %s122 = sphi 0, %s122
    %s124 = sphi 0, %s122
    %s125 = sphi 0, %s124
    %s139 = sphi 0, %s125
    %s147 = sphi 0, %s149
    %s150 = sphi 0, %s147
    %s151 = sphi 0, %s150
    %s167 = sphi 0, %s151
  $region4: #{feedforward_network_forward.1} parent=0 // loop_header_branch
    %14 = sbr.rel (%p12) target = $region8
  $region5: #{feedforward_network_forward.1} parent=0 // loop_body
    %s16 = ssub.s32 %s11, 1
    %s17 = ssub.s32 %s11, 2
    %s24 = sadd.s32 1, %s19
    %p25 = scmp.ge.s32.totalorder %s24, 1
    %s26 = scalar_select %p25, 0, %s24
    %s27 = sadd.s32 1, %s18
    %s28 = scalar_select %p25, %s27, %s18
    %p29 = scmp.ge.s32.totalorder %s28, 2
    %s30 = scalar_select %p29, 0, %s28
    %s31 = ssub.s32 %s18, %s30
    %s32 = ssub.s32 %s19, %s26
    %s33 = sor.u32 %s31, %s32
    %p34 = scmp.eq.s32.totalorder %s33, 0
    %s36 = sadd.s32 %s35, 1
    %s37 = scalar_select %p34, %s35, %s36
    %p40 = pneg %p34
    %p41 = scmp.eq.s32.totalorder %s11, 1
    %p42 = por %p40, %p41
    %p43 = scmp.ne.s32.totalorder %s35, %s38
    %p44 = scmp.eq.s32.totalorder %s11, 0
    %p45 = por %p43, %p44
    %p46 = scmp.ne.s32.totalorder %s35, %s38
    %p47 = scmp.eq.s32.totalorder %s16, 1
    %p48 = por %p46, %p47
    %p49 = scmp.ne.s32.totalorder %s38, %s39
    %p50 = scmp.eq.s32.totalorder %s16, 0
    %p51 = por %p49, %p50
    %p52 = scmp.ne.s32.totalorder %s38, %s39
    %p53 = scmp.eq.s32.totalorder %s17, 1
    %p54 = por %p52, %p53
    %p56 = scmp.ne.s32.totalorder %s39, %s55
    %p57 = scmp.eq.s32.totalorder %s17, 0
    %p58 = por %p56, %p57
    %s60 = sadd.s32 %s59, 1
    %p63 = scmp.eq.s32.totalorder %s11, 1
    %p64 = scmp.ne.s32.totalorder %s59, %s61
    %p65 = scmp.eq.s32.totalorder %s11, 0
    %p66 = por %p64, %p65
    %p67 = scmp.ne.s32.totalorder %s59, %s61
    %p68 = scmp.eq.s32.totalorder %s16, 1
    %p69 = por %p67, %p68
    %p70 = scmp.ne.s32.totalorder %s61, %s62
    %p71 = scmp.eq.s32.totalorder %s16, 0
    %p72 = por %p70, %p71
    %p73 = scmp.ne.s32.totalorder %s61, %s62
    %p74 = scmp.eq.s32.totalorder %s17, 1
    %p75 = por %p73, %p74
    %p77 = scmp.ne.s32.totalorder %s62, %s76
    %p78 = scmp.eq.s32.totalorder %s17, 0
    %p79 = por %p77, %p78
    %s81 = sadd.s32 %s80, 1
    %p84 = scmp.eq.s32.totalorder %s11, 1
    %p85 = scmp.ne.s32.totalorder %s80, %s82
    %p86 = scmp.eq.s32.totalorder %s11, 0
    %p87 = por %p85, %p86
    %p88 = scmp.ne.s32.totalorder %s80, %s82
    %p89 = scmp.eq.s32.totalorder %s16, 1
    %p90 = por %p88, %p89
    %p91 = scmp.ne.s32.totalorder %s82, %s83
    %p92 = scmp.eq.s32.totalorder %s16, 0
    %p93 = por %p91, %p92
    %p94 = scmp.ne.s32.totalorder %s82, %s83
    %p95 = scmp.eq.s32.totalorder %s17, 1
    %p96 = por %p94, %p95
    %p98 = scmp.ne.s32.totalorder %s83, %s97
    %p99 = scmp.eq.s32.totalorder %s17, 0
    %p100 = por %p98, %p99
    %s102 = sadd.s32 %s101, 1
    %p105 = scmp.eq.s32.totalorder %s11, 1
    %p106 = scmp.ne.s32.totalorder %s101, %s103
    %p107 = scmp.eq.s32.totalorder %s11, 0
    %p108 = por %p106, %p107
    %p109 = scmp.ne.s32.totalorder %s101, %s103
    %p110 = scmp.eq.s32.totalorder %s16, 1
    %p111 = por %p109, %p110
    %p112 = scmp.ne.s32.totalorder %s103, %s104
    %p113 = scmp.eq.s32.totalorder %s16, 0
    %p114 = por %p112, %p113
    %p115 = scmp.ne.s32.totalorder %s103, %s104
    %p116 = scmp.eq.s32.totalorder %s17, 1
    %p117 = por %p115, %p116
    %p119 = scmp.ne.s32.totalorder %s104, %s118
    %p120 = scmp.eq.s32.totalorder %s17, 0
    %p121 = por %p119, %p120
    %s123 = sadd.s32 %s122, 1
    %p126 = scmp.eq.s32.totalorder %s11, 1
    %p127 = scmp.ne.s32.totalorder %s122, %s124
    %p128 = scmp.eq.s32.totalorder %s11, 0
    %p129 = por %p127, %p128
    %p130 = scmp.ne.s32.totalorder %s122, %s124
    %p131 = scmp.eq.s32.totalorder %s16, 1
    %p132 = por %p130, %p131
    %p133 = scmp.ne.s32.totalorder %s124, %s125
    %p134 = scmp.eq.s32.totalorder %s16, 0
    %p135 = por %p133, %p134
    %p136 = scmp.ne.s32.totalorder %s124, %s125
    %p137 = scmp.eq.s32.totalorder %s17, 1
    %p138 = por %p136, %p137
    %p140 = scmp.ne.s32.totalorder %s125, %s139
    %p141 = scmp.eq.s32.totalorder %s17, 0
    %p142 = por %p140, %p141
    %s143 = ssub.s32 %s18, %s30
    %s144 = ssub.s32 %s19, %s26
    %s145 = sor.u32 %s143, %s144
    %p146 = scmp.eq.s32.totalorder %s145, 0
    %s148 = sadd.s32 %s147, 1
    %s149 = scalar_select %p146, %s147, %s148
    %p152 = pneg %p146
    %p153 = scmp.eq.s32.totalorder %s11, 1
    %p154 = por %p152, %p153
    %p155 = scmp.ne.s32.totalorder %s147, %s150
    %p156 = scmp.eq.s32.totalorder %s11, 0
    %p157 = por %p155, %p156
    %p158 = scmp.ne.s32.totalorder %s147, %s150
    %p159 = scmp.eq.s32.totalorder %s16, 1
    %p160 = por %p158, %p159
    %p161 = scmp.ne.s32.totalorder %s150, %s151
    %p162 = scmp.eq.s32.totalorder %s16, 0
    %p163 = por %p161, %p162
    %p164 = scmp.ne.s32.totalorder %s150, %s151
    %p165 = scmp.eq.s32.totalorder %s17, 1
    %p166 = por %p164, %p165
    %p168 = scmp.ne.s32.totalorder %s151, %s167
    %p169 = scmp.eq.s32.totalorder %s17, 0
    %p170 = por %p168, %p169
    %p171 = scmp.le.s32.totalorder 1, %s11
    %p172 = scmp.lt.s32.totalorder %s11, 3
    %p173 = pnand %p171, %p172
    %p174 = pneg %p173
    // Predicated region
    $region9: #{feedforward_network_forward.1} parent=5 // pred_check
      _
    $region10: #{feedforward_network_forward.1} parent=5 // pred_check_branch
      %176 = sbr.rel (%p173) target = $region12
    $region11: #{feedforward_network_forward.1} parent=5 // pred_region
      %s177 = ssub.s32 %s11, 1
      // Predicated region
      $region13: #{feedforward_network_forward.1} parent=11 // pred_check
        %p178 = pneg %p72
      $region14: #{feedforward_network_forward.1} parent=11 // pred_check_branch
        %180 = sbr.rel (%p178) target = $region16
      $region15: #{feedforward_network_forward.1} parent=11 // pred_region
        _
      $region16: #{feedforward_network_forward.1} parent=11 // pred_fallthru
        _
      // Predicated region
      $region17: #{feedforward_network_forward.1} parent=11 // pred_check
        %p181 = pneg %p93
      $region18: #{feedforward_network_forward.1} parent=11 // pred_check_branch
        %183 = sbr.rel (%p181) target = $region20
      $region19: #{feedforward_network_forward.1} parent=11 // pred_region
        _
      $region20: #{feedforward_network_forward.1} parent=11 // pred_fallthru
        _
      // Predicated region
      $region21: #{feedforward_network_forward.1} parent=11 // pred_check
        %p184 = pneg %p114
      $region22: #{feedforward_network_forward.1} parent=11 // pred_check_branch
        %186 = sbr.rel (%p184) target = $region24
      $region23: #{feedforward_network_forward.1} parent=11 // pred_region
        _
      $region24: #{feedforward_network_forward.1} parent=11 // pred_fallthru
        _
      // Predicated region
      $region25: #{feedforward_network_forward.1} parent=11 // pred_check
        %p187 = pneg %p135
      $region26: #{feedforward_network_forward.1} parent=11 // pred_check_branch
        %189 = sbr.rel (%p187) target = $region28
      $region27: #{feedforward_network_forward.1} parent=11 // pred_region
        _
      $region28: #{feedforward_network_forward.1} parent=11 // pred_fallthru
        _
    $region12: #{feedforward_network_forward.1} parent=5 // pred_fallthru
      _
    %p190 = scmp.lt.s32.totalorder %s11, 2
    // Predicated region
    $region29: #{feedforward_network_forward.1} parent=5 // pred_check
      %p191 = pneg %p190
    $region30: #{feedforward_network_forward.1} parent=5 // pred_check_branch
      %193 = sbr.rel (%p191) target = $region32
    $region31: #{feedforward_network_forward.1} parent=5 // pred_region
      // Predicated region
      $region33: #{feedforward_network_forward.1} parent=31 // pred_check
        %p194 = pneg %p45
      $region34: #{feedforward_network_forward.1} parent=31 // pred_check_branch
        %196 = sbr.rel (%p194) target = $region36
      $region35: #{feedforward_network_forward.1} parent=31 // pred_region
        %s197 = smul.u32 2, %s19
        %p198 = scmp.lt.s32.totalorder %s18, 1
        %s199 = scalar_select %p198, %s18, 1
        %p200 = scmp.lt.s32.totalorder %s197, 1
        %s201 = scalar_select %p200, %s197, 1
        %s202 = smul.addr %s199, 2
        %s203 = sadd.s32 %s201, %s202
        %s204 = smul.addr %s203, 4
        %s205 = scalar_lea.vmem %s0, %s204
        %s206 = smul.u32 2, %s19
      $region36: #{feedforward_network_forward.1} parent=31 // pred_fallthru
        _
    $region32: #{feedforward_network_forward.1} parent=5 // pred_fallthru
      _
    %p207 = scmp.le.s32.totalorder 1, %s11
    %p208 = scmp.lt.s32.totalorder %s11, 3
    %p209 = pnand %p207, %p208
    %p210 = pneg %p209
    // Predicated region
    $region37: #{feedforward_network_forward.1} parent=5 // pred_check
      _
    $region38: #{feedforward_network_forward.1} parent=5 // pred_check_branch
      %212 = sbr.rel (%p209) target = $region40
    $region39: #{feedforward_network_forward.1} parent=5 // pred_region
      %s213 = ssub.s32 %s11, 1
      %s214 = smul.u32 2, %s21
      %p215 = scmp.lt.s32.totalorder %s20, 1
      %s216 = scalar_select %p215, %s20, 1
      %p217 = scmp.lt.s32.totalorder %s214, 1
      %s218 = scalar_select %p217, %s214, 1
      %s219 = smul.addr %s216, 2
      %s220 = sadd.s32 %s218, %s219
      %s221 = smul.addr %s220, 4
      %s222 = scalar_lea.vmem %s0, %s221
      %p223 = pneg %p51
      %p224 = pneg %p48
      %p225 = pneg %p72
      %p226 = pneg %p69
      %p227 = pneg %p93
      %p228 = pneg %p90
      %p229 = pneg %p114
      %p230 = pneg %p111
      %p231 = pneg %p135
      %p232 = pneg %p132
      %p233 = pneg %p163
      %p234 = pneg %p160
      %s235 = smul.u32 2, %s21
      %p236 = scmp.lt.s32.totalorder %s20, 1
      %s237 = scalar_select %p236, %s20, 1
      %p238 = scmp.lt.s32.totalorder %s235, 1
      %s239 = scalar_select %p238, %s235, 1
      %s240 = smul.addr %s237, 2
      %s241 = sadd.s32 %s239, %s240
      %s242 = smul.addr %s241, 4
      %s243 = scalar_lea.vmem %s5, %s242
      %s244 = smul.u32 2, %s21
      %p245 = scmp.lt.s32.totalorder %s20, 1
      %s246 = scalar_select %p245, %s20, 1
      %p247 = scmp.lt.s32.totalorder %s244, 1
      %s248 = scalar_select %p247, %s244, 1
      %s249 = smul.addr %s246, 2
      %s250 = sadd.s32 %s248, %s249
      %s251 = smul.addr %s250, 4
      %s252 = scalar_lea.vmem %s0, %s251
      %s253 = smul.u32 2, %s21
      %s254 = smul.u32 2, %s21
      %p255 = scmp.lt.s32.totalorder %s20, 1
      %s256 = scalar_select %p255, %s20, 1
      %p257 = scmp.lt.s32.totalorder %s254, 1
      %s258 = scalar_select %p257, %s254, 1
      %s259 = smul.addr %s256, 2
      %s260 = sadd.s32 %s258, %s259
      %s261 = smul.addr %s260, 4
      %s262 = scalar_lea.vmem %s5, %s261
      %s263 = smul.u32 2, %s21
      %v264 = vld [vmem:[%s252] sm:$0xff]
      %v265 = vld [vmem:[%s1] sm:$0xff]
      %v266 = vld [vmem:[%s1 + $0x8] sm:$0xff]
      %v267 = vld [vmem:[%s2] sm:$0xff]
      %v268 = vld [vmem:[%s2 + $0x8] sm:$0xff]
      %270 = vset.pattern.permute.xlu0 0
      %271 = vperm.xlu0 %270, %v267
      %v272 = vpop.permute.xlu0 %271
      %275 = vset.pattern.permute.xlu0 0
      %276 = vperm.xlu0 %275, %v268
      %v277 = vpop.permute.xlu0 %276
      %280 = vst [vmem:[#allocation1] ss:$2 sm:$0xff] %v264
      %v281 = vld.sshfl [vmem:[#allocation1] sm:$0xff pattern:$0x75316420]
      %v282 = vld.sshfl [vmem:[#allocation1 + $0x8] sm:$0xff pattern:$0x75316420]
      %vm283 = vcmask 31744
      %v285 = vsel %vm283, %v265, 0
      %v288 = vsel %vm283, %v266, 0
      %vm290 = vcmask 1043456
      %v291 = vsel %vm290, %v281, 0
      %v293 = vsel %vm290, %v282, 0
      %295 = vmatpush.msra.mxu0 0.0
      %296 = vmatpush.msra.mxu0 0.0
      %297 = vmatpush.msra.mxu0 0.0
      %298 = vmatpush.msra.mxu0 0.0
      %299 = vmatpush.msra.mxu0 0.0
      %300 = vmatpush.msra.mxu0 0.0
      %301 = vmatpush.msra.mxu0 0.0
      %302 = vmatpush.msra.mxu0 0.0
      %303 = vmatpush.msra.mxu0 0.0
      %304 = vmatpush.msra.mxu0 0.0
      %305 = vmatpush.msra.mxu0 0.0
      %306 = vmatpush.msra.mxu0 0.0
      %307 = vmatpush.msra.mxu0 0.0
      %308 = vmatpush.msra.mxu0 0.0
      %309 = vmatpush.msra.mxu0 0.0
      %310 = vmatpush.msra.mxu0 %v291
      %311 = vmatmul.f32.gmra.mxu0 %v285
      %v312 = vpop.f32.mrf.mxu0
      %v313 = vadd.f32 %v272, %v312
      %314 = vmatmul.f32.gmra.mxu0 %v288
      %v315 = vpop.f32.mrf.mxu0
      %v316 = vadd.f32 %v277, %v315
      %317 = vdwg.mxu0
      %318 = vmatpush.msra.mxu0 0.0
      %319 = vmatpush.msra.mxu0 0.0
      %320 = vmatpush.msra.mxu0 0.0
      %321 = vmatpush.msra.mxu0 0.0
      %322 = vmatpush.msra.mxu0 0.0
      %323 = vmatpush.msra.mxu0 0.0
      %324 = vmatpush.msra.mxu0 0.0
      %325 = vmatpush.msra.mxu0 0.0
      %326 = vmatpush.msra.mxu0 0.0
      %327 = vmatpush.msra.mxu0 0.0
      %328 = vmatpush.msra.mxu0 0.0
      %329 = vmatpush.msra.mxu0 0.0
      %330 = vmatpush.msra.mxu0 0.0
      %331 = vmatpush.msra.mxu0 0.0
      %332 = vmatpush.msra.mxu0 0.0
      %333 = vmatpush.msra.mxu0 %v293
      %334 = vmatmul.f32.gmra.mxu0 %v285
      %v335 = vpop.f32.mrf.mxu0
      %v336 = vadd.f32 %v272, %v335
      %337 = vmatmul.f32.gmra.mxu0 %v288
      %v338 = vpop.f32.mrf.mxu0
      %v339 = vadd.f32 %v277, %v338
      %340 = vdwg.mxu0
      %v341 = vmul.f32 %v313, 0.70710677
      %v342 = vmul.f32 %v336, 0.70710677
      %v343 = vmul.f32 %v316, 0.70710677
      %v344 = vmul.f32 %v339, 0.70710677
      %v345 = vand.u32 2147483647, %v341
      %v346 = vand.u32 2147483647, %v342
      %v347 = vand.u32 2147483647, %v343
      %v348 = vand.u32 2147483647, %v344
      %v349 = vmul.f32 %v345, 0.3275911
      %v350 = vmul.f32 %v346, 0.3275911
      %v351 = vmul.f32 %v347, 0.3275911
      %v352 = vmul.f32 %v348, 0.3275911
      %v353 = vadd.f32 %v349, 1.0
      %v354 = vadd.f32 %v350, 1.0
      %v355 = vadd.f32 %v351, 1.0
      %v356 = vadd.f32 %v352, 1.0
      %v357 = vrcp.pop %v353
      %v358 = vrcp.pop %v354
      %v359 = vrcp.pop %v355
      %v360 = vrcp.pop %v356
      %v361 = vmul.f32 %v357, 0.5307027
      %v362 = vmul.f32 %v358, 0.5307027
      %v363 = vmul.f32 %v359, 0.5307027
      %v364 = vmul.f32 %v360, 0.5307027
      %v365 = vadd.f32 %v361, -0.72657603
      %v366 = vadd.f32 %v362, -0.72657603
      %v367 = vadd.f32 %v363, -0.72657603
      %v368 = vadd.f32 %v364, -0.72657603
      %v369 = vmul.f32 %v365, %v357
      %v370 = vmul.f32 %v366, %v358
      %v371 = vmul.f32 %v367, %v359
      %v372 = vmul.f32 %v368, %v360
      %v373 = vadd.f32 %v369, 0.7107069
      %v374 = vadd.f32 %v370, 0.7107069
      %v375 = vadd.f32 %v371, 0.7107069
      %v376 = vadd.f32 %v372, 0.7107069
      %v377 = vmul.f32 %v373, %v357
      %v378 = vmul.f32 %v374, %v358
      %v379 = vmul.f32 %v375, %v359
      %v380 = vmul.f32 %v376, %v360
      %v381 = vadd.f32 %v377, -0.14224836
      %v382 = vadd.f32 %v378, -0.14224836
      %v383 = vadd.f32 %v379, -0.14224836
      %v384 = vadd.f32 %v380, -0.14224836
      %v385 = vmul.f32 %v381, %v357
      %v386 = vmul.f32 %v382, %v358
      %v387 = vmul.f32 %v383, %v359
      %v388 = vmul.f32 %v384, %v360
      %v389 = vadd.f32 %v385, 0.1274148
      %v390 = vadd.f32 %v386, 0.1274148
      %v391 = vadd.f32 %v387, 0.1274148
      %v392 = vadd.f32 %v388, 0.1274148
      %v393 = vmul.f32 %v389, %v357
      %v394 = vmul.f32 %v390, %v358
      %v395 = vmul.f32 %v391, %v359
      %v396 = vmul.f32 %v392, %v360
      %v397 = vmul.f32 %v313, %v393
      %v398 = vmul.f32 %v336, %v394
      %v399 = vmul.f32 %v316, %v395
      %v400 = vmul.f32 %v339, %v396
      %v401 = vmul.f32 %v345, %v345
      %v402 = vmul.f32 %v346, %v346
      %v403 = vmul.f32 %v347, %v347
      %v404 = vmul.f32 %v348, %v348
      %v405 = vsub.f32 0.0, %v401
      %v406 = vsub.f32 0.0, %v402
      %v407 = vsub.f32 0.0, %v403
      %v408 = vsub.f32 0.0, %v404
      %v409 = vmul.f32 %v405, 1.442695
      %v410 = vpow.pop %v409
      %v411 = vmul.f32 %v406, 1.442695
      %v412 = vpow.pop %v411
      %v413 = vmul.f32 %v407, 1.442695
      %v414 = vpow.pop %v413
      %v415 = vmul.f32 %v408, 1.442695
      %v416 = vpow.pop %v415
      %v417 = vmul.f32 %v397, %v410
      %v418 = vmul.f32 %v398, %v412
      %v419 = vmul.f32 %v399, %v414
      %v420 = vmul.f32 %v400, %v416
      %vm421 = vcmp.ge.f32.partialorder %v313, 0.0
      %vm422 = vcmp.ge.f32.partialorder %v336, 0.0
      %vm423 = vcmp.ge.f32.partialorder %v316, 0.0
      %vm424 = vcmp.ge.f32.partialorder %v339, 0.0
      %v425 = vsub.f32 %v313, %v417
      %v426 = vsub.f32 %v336, %v418
      %v427 = vsub.f32 %v316, %v419
      %v428 = vsub.f32 %v339, %v420
      %v429 = vsel %vm421, %v425, %v417
      %v430 = vsel %vm422, %v426, %v418
      %v431 = vsel %vm423, %v427, %v419
      %v432 = vsel %vm424, %v428, %v420
      %v433 = vld [vmem:[%s3] sm:$0xf]
      %v434 = vld [vmem:[%s4] sm:$0xf]
      %436 = vset.pattern.permute.xlu0 0
      %437 = vperm.xlu0 %436, %v434
      %v438 = vpop.permute.xlu0 %437
      %vm440 = vcmask 130048
      %v442 = vsel %vm440, %v433, 0
      %444 = vmatpush.msra.mxu0 0.0
      %445 = vmatpush.msra.mxu0 0.0
      %446 = vmatpush.msra.mxu0 0.0
      %447 = vmatpush.msra.mxu0 0.0
      %448 = vmatpush.msra.mxu0 0.0
      %449 = vmatpush.msra.mxu0 0.0
      %450 = vmatpush.msra.mxu0 0.0
      %451 = vmatpush.msra.mxu0 0.0
      %452 = vmatpush.msra.mxu0 0.0
      %453 = vmatpush.msra.mxu0 0.0
      %454 = vmatpush.msra.mxu0 0.0
      %455 = vmatpush.msra.mxu0 0.0
      %456 = vmatpush.msra.mxu0 0.0
      %457 = vmatpush.msra.mxu0 0.0
      %458 = vmatpush.msra.mxu0 %v431
      %459 = vmatpush.msra.mxu0 %v429
      %460 = vmatmul.f32.gmra.mxu0 %v442
      %v461 = vpop.f32.mrf.mxu0
      %v462 = vadd.f32 %v438, %v461
      %463 = vdwg.mxu0
      %464 = vmatpush.msra.mxu0 0.0
      %465 = vmatpush.msra.mxu0 0.0
      %466 = vmatpush.msra.mxu0 0.0
      %467 = vmatpush.msra.mxu0 0.0
      %468 = vmatpush.msra.mxu0 0.0
      %469 = vmatpush.msra.mxu0 0.0
      %470 = vmatpush.msra.mxu0 0.0
      %471 = vmatpush.msra.mxu0 0.0
      %472 = vmatpush.msra.mxu0 0.0
      %473 = vmatpush.msra.mxu0 0.0
      %474 = vmatpush.msra.mxu0 0.0
      %475 = vmatpush.msra.mxu0 0.0
      %476 = vmatpush.msra.mxu0 0.0
      %477 = vmatpush.msra.mxu0 0.0
      %478 = vmatpush.msra.mxu0 %v432
      %479 = vmatpush.msra.mxu0 %v430
      %480 = vmatmul.f32.gmra.mxu0 %v442
      %v481 = vpop.f32.mrf.mxu0
      %v482 = vadd.f32 %v438, %v481
      %483 = vdwg.mxu0
      %v486 = vrot.slane %v482, 4
      %v487 = vsel %vm290, %v462, %v486
      %489 = vst [vmem:[%s262] sm:$0xff] %v487
      %s490 = smul.u32 2, %s21
      %p491 = scmp.lt.s32.totalorder %s20, 1
      %s492 = scalar_select %p491, %s20, 1
      %p493 = scmp.lt.s32.totalorder %s490, 1
      %s494 = scalar_select %p493, %s490, 1
      %s495 = smul.addr %s492, 2
      %s496 = sadd.s32 %s494, %s495
      %s497 = smul.addr %s496, 4
      %s498 = scalar_lea.vmem %s5, %s497
      // Predicated region
      $region41: #{feedforward_network_forward.1} parent=39 // pred_check
        %p499 = pneg %p160
      $region42: #{feedforward_network_forward.1} parent=39 // pred_check_branch
        %501 = sbr.rel (%p499) target = $region44
      $region43: #{feedforward_network_forward.1} parent=39 // pred_region
        %s502 = smul.u32 2, %s21
      $region44: #{feedforward_network_forward.1} parent=39 // pred_fallthru
        _
    $region40: #{feedforward_network_forward.1} parent=5 // pred_fallthru
      _
    %p503 = scmp.le.s32.totalorder 2, %s11
    // Predicated region
    $region45: #{feedforward_network_forward.1} parent=5 // pred_check
      %p504 = pneg %p503
    $region46: #{feedforward_network_forward.1} parent=5 // pred_check_branch
      %506 = sbr.rel (%p504) target = $region48
    $region47: #{feedforward_network_forward.1} parent=5 // pred_region
      %s507 = ssub.s32 %s11, 2
      // Predicated region
      $region49: #{feedforward_network_forward.1} parent=47 // pred_check
        %p508 = pneg %p166
      $region50: #{feedforward_network_forward.1} parent=47 // pred_check_branch
        %510 = sbr.rel (%p508) target = $region52
      $region51: #{feedforward_network_forward.1} parent=47 // pred_region
        %s511 = smul.u32 2, %s23
        %p512 = scmp.lt.s32.totalorder %s22, 1
        %s513 = scalar_select %p512, %s22, 1
        %p514 = scmp.lt.s32.totalorder %s511, 1
        %s515 = scalar_select %p514, %s511, 1
        %s516 = smul.addr %s513, 2
        %s517 = sadd.s32 %s515, %s516
        %s518 = smul.addr %s517, 4
        %s519 = scalar_lea.vmem %s5, %s518
      $region52: #{feedforward_network_forward.1} parent=47 // pred_fallthru
        _
    $region48: #{feedforward_network_forward.1} parent=5 // pred_fallthru
      _
  $region6: #{feedforward_network_forward.1} parent=0 // loop_footer
    %s15 = sadd.s32 1, %s11
  $region7: #{feedforward_network_forward.1} parent=0 // loop_footer_branch
    %10 = sbr.rel target = $region3
  $region8: #{feedforward_network_forward.1} parent=0 // loop_exit
    _

</llo_original>
